<compile_context>
chip_gen: v7x
topology: tpu7x:2x2x1
jax: 0.10.0
libtpu: 0.0.40
codegen_flags: <defaults>
</compile_context>

<pallas_src>
import functools

import jax
import jax.numpy as jnp
from jax.experimental import pallas as pl
from jax.experimental.pallas import tpu as pltpu

_LANE = 128
_PER_BUFFER_BYTES = 8 << 20      # ~8 MiB per VMEM block buffer (v7x-safe)
_SINGLE_BLOCK_BYTES = 512 << 10  # below this, a single block is cheapest
_VMEM_HEADROOM = 8 << 20


def _swish_kernel(x_ref, o_ref, *, compute_dtype):
    x = x_ref[...].astype(compute_dtype)
    half = jnp.asarray(0.5, compute_dtype)
    one = jnp.asarray(1.0, compute_dtype)
    # sigmoid(x) == 0.5 * (tanh(0.5 * x) + 1): single EUP op per element.
    sig = half * (jnp.tanh(half * x) + one)
    o_ref[...] = (x * sig).astype(o_ref.dtype)


def _compute_dtype_for(dtype):
    """bf16 compute on bf16-capable VPU/EUP chips (v6e/v7x); f32 elsewhere."""
    if jnp.dtype(dtype) != jnp.dtype(jnp.bfloat16):
        return jnp.float32
    try:
        kind = jax.devices()[0].device_kind.lower()
    except Exception:
        return jnp.float32
    if any(tag in kind for tag in ("v6", "v7", "7x")):
        return jnp.bfloat16
    return jnp.float32


def _pick_width(n_aligned):
    """Largest lane-dense minor dim that keeps the reshape zero-copy."""
    for w in (1024, 512, 256, 128):
        if n_aligned % w == 0:
            return w
    return _LANE


def _choose_tiling(rows, width, itemsize):
    """Return (tile_rows, grid_steps) for a (rows, width) array."""
    row_bytes = width * itemsize
    total_bytes = rows * row_bytes
    if total_bytes <= _SINGLE_BLOCK_BYTES or rows < 32:
        # Tiny tensor: one full-array block (full dims satisfy the (8,128) rule).
        return rows, 1
    # Per-buffer byte budget, rounded down to a multiple of 8 rows.
    budget_rows = max(8, (_PER_BUFFER_BYTES // row_bytes) // 8 * 8)
    # Aim for >= ~4 grid steps so DMA/compute overlap and the "parallel" axis
    # can shard across TensorCores; never exceed the byte budget per block.
    target_rows = ((pl.cdiv(rows, 4) + 7) // 8) * 8
    tile_rows = max(8, min(budget_rows, target_rows))
    grid_steps = pl.cdiv(rows, tile_rows)
    return tile_rows, grid_steps


def _swish_pallas_1d(flat):
    """Run the Pallas kernel on a flat, 128-aligned float array."""
    n = flat.shape[0]
    dtype = flat.dtype
    itemsize = jnp.dtype(dtype).itemsize

    width = _pick_width(n)
    rows = n // width
    x2d = flat.reshape(rows, width)  # zero-copy: contiguous flat buffer

    tile_rows, grid_steps = _choose_tiling(rows, width, itemsize)
    block_bytes = tile_rows * width * itemsize
    # in + out, double-buffered, plus compiler scratch headroom (<= 48 MiB,
    # safe on v7x's 64 MiB physical VMEM).
    vmem_limit = min(4 * block_bytes + _VMEM_HEADROOM, 48 << 20)

    compute_dtype = _compute_dtype_for(dtype)
    kernel = functools.partial(_swish_kernel, compute_dtype=compute_dtype)

    cost = pl.CostEstimate(
        flops=5 * n,
        transcendentals=n,
        bytes_accessed=2 * n * itemsize,
    )

    out2d = pl.pallas_call(
        kernel,
        out_shape=jax.ShapeDtypeStruct((rows, width), dtype),
        grid=(grid_steps,),
        in_specs=[pl.BlockSpec((tile_rows, width), lambda i: (i, 0))],
        out_specs=pl.BlockSpec((tile_rows, width), lambda i: (i, 0)),
        compiler_params=pltpu.CompilerParams(
            dimension_semantics=("parallel",),
            vmem_limit_bytes=vmem_limit,
        ),
        cost_estimate=cost,
    )(x2d)

    return out2d.reshape(-1)


def swish(x):
    """Elementwise x * sigmoid(x) (Swish / SiLU) via a Pallas TPU kernel."""
    assert jnp.issubdtype(x.dtype, jnp.floating), "swish expects a float dtype"
    orig_shape = x.shape
    dtype = x.dtype
    n = x.size
    if n == 0:
        return x

    flat = x.reshape(-1)
    aligned = (n // _LANE) * _LANE

    if aligned == 0:
        # Sub-128-element tensor: plain jnp is already a single fused pass.
        return (x * jax.nn.sigmoid(x)).astype(dtype)

    if aligned == n:
        out = _swish_pallas_1d(flat)
    else:
        # Rare ragged size: kernel on the 128-aligned prefix, jnp on the
        # <=127-element tail (avoids a full-tensor jnp.pad + slice round trip).
        head = flat[:aligned]
        tail = flat[aligned:]
        out_head = _swish_pallas_1d(head)
        out_tail = (tail * jax.nn.sigmoid(tail)).astype(dtype)
        out = jnp.concatenate([out_head, out_tail])

    return out.reshape(orig_shape)


if __name__ == "__main__":
    key = jax.random.PRNGKey(0)
    k0, k1, k2, k3 = jax.random.split(key, 4)

    # Small NCHW input consistent with typical conv-net usage of Swish.
    x = jax.random.normal(k0, (2, 4, 16, 16), dtype=jnp.float32)
    out = jax.block_until_ready(swish(x))
    ref = x * jax.nn.sigmoid(x)
    assert out.shape == x.shape and out.dtype == x.dtype
    assert jnp.allclose(out, ref, atol=1e-5, rtol=1e-5)

    # Mid-size input: exercises the multi-step grid (pipelined, >=4 blocks).
    x_mid = jax.random.normal(k1, (4, 8, 64, 128), dtype=jnp.float32)
    out_mid = jax.block_until_ready(swish(x_mid))
    ref_mid = x_mid * jax.nn.sigmoid(x_mid)
    assert jnp.allclose(out_mid, ref_mid, atol=1e-5, rtol=1e-5)

    # bf16 path (bf16 compute on v6e/v7x, f32 compute elsewhere).
    x_bf = jax.random.normal(k2, (2, 4, 32, 128), dtype=jnp.bfloat16)
    out_bf = jax.block_until_ready(swish(x_bf))
    ref_bf = (x_bf.astype(jnp.float32) * jax.nn.sigmoid(x_bf.astype(jnp.float32)))
    assert out_bf.shape == x_bf.shape and out_bf.dtype == x_bf.dtype
    assert jnp.allclose(out_bf.astype(jnp.float32), ref_bf, atol=5e-2, rtol=5e-2)

    # Non-128-divisible fallback path (prefix kernel / tail jnp or pure jnp).
    x2 = jax.random.normal(k3, (3, 5, 7), dtype=jnp.float32)
    out2 = jax.block_until_ready(swish(x2))
    ref2 = x2 * jax.nn.sigmoid(x2)
    assert out2.shape == x2.shape and out2.dtype == x2.dtype
    assert jnp.allclose(out2, ref2, atol=1e-5, rtol=1e-5)

    print("KERNEL_OK")
</pallas_src>

<mosaic_0001>
module attributes {stable_mosaic.version = 11 : i64} {
  func.func @_swish_kernel(%arg0: i32, %arg1: memref<2x1024xf32, #tpu.memory_space<vmem>>, %arg2: memref<2x1024xf32, #tpu.memory_space<vmem>>) attributes {dimension_semantics = [#tpu.dimension_semantics<parallel>], iteration_bounds = array<i64: 1>, scalar_prefetch = 0 : i64, scratch_operands = 0 : i64, tpu.core_type = #tpu.core_type<tc>, window_params = [{transform_indices = @transform_0, window_bounds = array<i64: 2, 1024>}, {transform_indices = @transform_1, window_bounds = array<i64: 2, 1024>}]} {
    %c0 = arith.constant 0 : index
    %c0_0 = arith.constant 0 : index
    %0 = vector.load %arg1[%c0, %c0_0] : memref<2x1024xf32, #tpu.memory_space<vmem>>, vector<2x1024xf32>
    %cst = arith.constant 5.000000e-01 : f32
    %1 = vector.broadcast %cst : f32 to vector<2x1024xf32>
    %2 = arith.mulf %1, %0 : vector<2x1024xf32>
    %3 = math.tanh %2 : vector<2x1024xf32>
    %cst_1 = arith.constant 1.000000e+00 : f32
    %4 = vector.broadcast %cst_1 : f32 to vector<2x1024xf32>
    %5 = arith.addf %3, %4 : vector<2x1024xf32>
    %cst_2 = arith.constant 5.000000e-01 : f32
    %6 = vector.broadcast %cst_2 : f32 to vector<2x1024xf32>
    %7 = arith.mulf %6, %5 : vector<2x1024xf32>
    %8 = arith.mulf %0, %7 : vector<2x1024xf32>
    %c0_3 = arith.constant 0 : index
    %c0_4 = arith.constant 0 : index
    %9 = vector.load %arg2[%c0_3, %c0_4] : memref<2x1024xf32, #tpu.memory_space<vmem>>, vector<2x1024xf32>
    tpu.vector_store %arg2[%c0_3, %c0_4], %8 {strides = array<i32>} : memref<2x1024xf32, #tpu.memory_space<vmem>>, vector<2x1024xf32>,
    return
  }
  func.func @transform_0(%arg0: i32) -> (i32, i32) {
    %c0_i32 = arith.constant 0 : i32
    %c0_i32_0 = arith.constant 0 : i32
    return %arg0, %c0_i32 : i32, i32
  }
  func.func @transform_1(%arg0: i32) -> (i32, i32) {
    %c0_i32 = arith.constant 0 : i32
    %c0_i32_0 = arith.constant 0 : i32
    return %arg0, %c0_i32 : i32, i32
  }
}

</mosaic_0001>

<llo_original>
// kernel: tpu_custom_call.1
$region0: #{tpu_custom_call.1}
  #allocation0 [shape = 'u32[]', space=smem, size = 0x4, offset = 0x4, fixed_abs, tag = 'smem constant byte address 0x4 - core index']
  #allocation1 [shape = 'u32[144,128]{1,0:T(1,128)}', space=vmem, size = 0x12000, scoped, tag = 'internal scratch']
  %s0 = inlined_call_operand.hbm [shape: f32[2,1024], index: 0, kind: input, shape index: {}]
  %s1 = inlined_call_operand.hbm [shape: f32[2,1024], index: 1, kind: output, shape index: {}]
  %s2 = sld [smem:[#allocation0]]
  $region18: #{tpu_custom_call.1} parent=0
    _
  %s4 = ssub.s32 1, %s2
  %s5 = scalar_select 0, %s4, %s2
  $region1: #{tpu_custom_call.1} parent=0
    #allocation2 [shape = 'u8[8192]{0}', space=vmem, size = 0x2000, scoped, tag = 'input window, operand 0, single buffered']
    #allocation3 [shape = 's32[1]{0}', space=sflag, size = 0x4, scoped, tag = 'scoped memory for tpu_custom_call.1']
    #allocation4 [shape = 's32[1]{0}', space=sflag, size = 0x4, scoped, tag = 'scoped memory for tpu_custom_call.1']
    #allocation5 [shape = 'u8[8192]{0}', space=vmem, size = 0x2000, scoped, tag = 'output window, operand 0, single buffered']
    %6 = vsyncpa [#allocation3], 0
    %7 = vsyncpa [#allocation4], 0
    // Predicated region
    $region2: #{tpu_custom_call.1} parent=1 // pred_check
      _
    $region3: #{tpu_custom_call.1} parent=1 // pred_check_branch
      %9 = sbr.rel (0) target = $region5
    $region4: #{tpu_custom_call.1} parent=1 // pred_region
      %s11 = ssub.s32 256, 256
      %12 = vsyncadd [#allocation3], %s11
      %s14 = sshll.u32 [#allocation2], 4
      %s15 = int_to_ptr.vmem [resolvable:$true] %s14
      %17 = dma.hbm_to_vmem [thread:$0]  %s0, 256, %s15, [#allocation3]
    $region5: #{tpu_custom_call.1} parent=1 // pred_fallthru
      _
    // Predicated region
    $region6: #{tpu_custom_call.1} parent=1 // pred_check
      _
    $region7: #{tpu_custom_call.1} parent=1 // pred_check_branch
      %19 = sbr.rel (0) target = $region9
    $region8: #{tpu_custom_call.1} parent=1 // pred_region
      %20 = dma.done [#allocation3], 256
    $region9: #{tpu_custom_call.1} parent=1 // pred_fallthru
      _
    %v21 = vld [vmem:[#allocation2] sm:$0xff]
    %v22 = vld [vmem:[#allocation2 + $0x8] sm:$0xff]
    %v23 = vmul.f32 %v21, 0.5
    %v24 = vmul.f32 %v22, 0.5
    %v25 = vtanh.pop %v23
    %v26 = vtanh.pop %v24
    %v27 = vadd.f32 %v25, 1.0
    %v28 = vadd.f32 %v26, 1.0
    %v29 = vmul.f32 %v27, 0.5
    %v30 = vmul.f32 %v28, 0.5
    %v31 = vmul.f32 %v21, %v29
    %v32 = vmul.f32 %v22, %v30
    %33 = vst [vmem:[#allocation5] sm:$0xff] %v31
    %34 = vst [vmem:[#allocation5 + $0x8] sm:$0xff] %v32
    // Predicated region
    $region10: #{tpu_custom_call.1} parent=1 // pred_check
      _
    $region11: #{tpu_custom_call.1} parent=1 // pred_check_branch
      %36 = sbr.rel (0) target = $region13
    $region12: #{tpu_custom_call.1} parent=1 // pred_region
      %s38 = ssub.s32 256, 256
      %39 = vsyncadd [#allocation4], %s38
      %s41 = sshll.u32 [#allocation5], 4
      %s42 = int_to_ptr.vmem [resolvable:$true] %s41
      %44 = dma.vmem_to_hbm [thread:$0]  %s42, 256, %s1, [#allocation4]
    $region13: #{tpu_custom_call.1} parent=1 // pred_fallthru
      _
    // Predicated region
    $region14: #{tpu_custom_call.1} parent=1 // pred_check
      _
    $region15: #{tpu_custom_call.1} parent=1 // pred_check_branch
      %46 = sbr.rel (0) target = $region17
    $region16: #{tpu_custom_call.1} parent=1 // pred_region
      %47 = dma.done [#allocation4], 256
    $region17: #{tpu_custom_call.1} parent=1 // pred_fallthru
      _
    %48 = vsyncpa [#allocation3], 1
    %49 = vsyncpa [#allocation4], 1

</llo_original>
